<compile_context>
chip_gen: v7x
topology: tpu7x:2x2x1
jax: 0.10.0
libtpu: 0.0.40
codegen_flags: <defaults>
</compile_context>

<pallas_src>
import jax
import jax.numpy as jnp
from jax.experimental import pallas as pl
from jax.experimental.pallas import tpu as pltpu


def _color_affine_kernel(params_ref, x_ref, o_ref):
    # params_ref: (R, 2) float32 — column 0 = per-row scale, column 1 = per-row shift.
    # x_ref/o_ref: (R, T) lane-dense tile of the flattened image.
    p = params_ref[...]                      # (R, 2) f32
    scale = p[:, 0:1]                        # (R, 1)
    shift = p[:, 1:2]                        # (R, 1)
    y = x_ref[...].astype(jnp.float32) * scale + shift   # f32 FMA, HBM-bound anyway
    o_ref[...] = y.astype(o_ref.dtype)


def _tpu_block_budget():
    """(target_block_bytes, vmem_limit_bytes or None) per TPU generation."""
    try:
        kind = jax.devices()[0].device_kind.lower()
    except Exception:  # pragma: no cover - conservative fallback
        kind = ""
    if "v5" in kind:
        # v5e scoped VMEM default is only 16 MiB: keep ~2 MiB blocks
        # (in+out double-buffered ~8 MiB) and don't raise the limit.
        return 2 * 1024 * 1024, None
    if "v6" in kind:
        # 32 MiB scoped default: 4 MiB blocks fit comfortably with double buffering.
        return 4 * 1024 * 1024, None
    if "v7" in kind or "7x" in kind:
        # 3.2 TB/s HBM per TC: bigger blocks amortize per-step overhead. Raise scoped
        # VMEM explicitly but stay well under the 64 MiB physical per-TC capacity.
        return 6 * 1024 * 1024, 48 * 1024 * 1024
    # Unknown generation: be conservative.
    return 2 * 1024 * 1024, None


def _choose_fold(M, L, pack):
    """Smallest k s.t. (M*k, L//k) has pack-aligned rows and wide, 128-aligned lanes."""
    if M % pack == 0 and M >= 2 * pack:
        return 1  # already sublane-dense and splittable
    for k in range(1, 257):
        if L % k:
            continue
        lanes = L // k
        if lanes < 512 or lanes % 128:
            continue  # keep lanes wide and unmasked
        if (M * k) % pack == 0:
            return k
    return 1


def color_randomizer(x, scale, shift):
    """out[n,c,h,w] = x[n,c,h,w] * scale[c] + shift[c]   (NCHW, channel-wise affine)."""
    N, C, H, W = x.shape
    dtype = x.dtype
    itemsize = jnp.dtype(dtype).itemsize
    pack = {4: 8, 2: 16, 1: 32}.get(itemsize, 8)   # dtype-dependent sublane pack

    M, L = N * C, H * W
    k = _choose_fold(M, L, pack)
    M_eff, L_eff = M * k, L // k

    # Lane-dense flatten (free for contiguous NCHW). Row r covers channel (r // k) % C.
    x2 = x.reshape(M_eff, L_eff)

    chan = (jnp.arange(M_eff, dtype=jnp.int32) // k) % C
    scale_rows = scale.reshape(C).astype(jnp.float32)[chan]
    shift_rows = shift.reshape(C).astype(jnp.float32)[chan]
    params = jnp.stack([scale_rows, shift_rows], axis=-1)   # (M_eff, 2) float32

    target_block_bytes, vmem_limit = _tpu_block_budget()

    # ---- tile sizing ---------------------------------------------------------
    # Lane (last) dim: full width if it fits, else a large multiple of 128.
    max_lanes = 8192
    T = L_eff if L_eff <= max_lanes else max_lanes

    # Sublane (row) dim: fill up to target_block_bytes; multiple of pack or full extent.
    target_rows = max(pack, target_block_bytes // max(1, T * itemsize))
    if M_eff <= max(target_rows, pack):
        R = M_eff
    else:
        R = min((target_rows // pack) * pack, (M_eff // pack) * pack)
        R = max(R, pack)

    # Guarantee >= 2 grid steps along a parallel axis on non-tiny tensors so both
    # v7x TensorCores stream (harmless extra step on single-TC chips).
    total_bytes = M_eff * L_eff * itemsize
    if (-(-M_eff // R)) * (-(-L_eff // T)) == 1 and total_bytes > 2 * 1024 * 1024:
        if M_eff >= 2 * pack:
            R = max(pack, ((M_eff // 2 + pack - 1) // pack) * pack)
        elif L_eff >= 256:
            T = max(128, ((L_eff // 2 + 127) // 128) * 128)

    grid = (pl.cdiv(M_eff, R), pl.cdiv(L_eff, T))

    out2 = pl.pallas_call(
        _color_affine_kernel,
        out_shape=jax.ShapeDtypeStruct((M_eff, L_eff), dtype),
        grid=grid,
        in_specs=[
            pl.BlockSpec((R, 2), lambda i, j: (i, 0)),   # packed per-row {scale, shift}
            pl.BlockSpec((R, T), lambda i, j: (i, j)),   # x tile
        ],
        out_specs=pl.BlockSpec((R, T), lambda i, j: (i, j)),
        compiler_params=pltpu.CompilerParams(
            dimension_semantics=("parallel", "parallel"),
            vmem_limit_bytes=vmem_limit,
        ),
    )(params, x2)

    return out2.reshape(N, C, H, W)


if __name__ == "__main__":
    key = jax.random.PRNGKey(0)
    kx, kw, ks = jax.random.split(key, 3)

    # Small shapes consistent with the module: batch=2, channels=3 (RGB), spatial=16.
    N, C, H, W = 2, 3, 16, 16
    x = jax.random.normal(kx, (N, C, H, W), dtype=jnp.float32)

    # Deterministic samples mirroring Uniform(0.77, 1.417) and Uniform(-0.1, 0.1).
    new_white = jax.random.uniform(kw, (C,), dtype=jnp.float32, minval=0.77, maxval=1.417)
    color_shift = jax.random.uniform(ks, (C,), dtype=jnp.float32, minval=-0.1, maxval=0.1)

    out = color_randomizer(x, new_white, color_shift)
    out = jax.block_until_ready(out)

    # Reference: same broadcast semantics as the PyTorch (3,1,1) parameter tensors.
    ref = x * new_white.reshape(1, C, 1, 1) + color_shift.reshape(1, C, 1, 1)
    assert out.shape == x.shape and out.dtype == x.dtype
    assert jnp.allclose(out, ref, atol=1e-6), "mismatch vs reference"

    print("KERNEL_OK")
</pallas_src>

<mosaic_0001>
module attributes {stable_mosaic.version = 11 : i64} {
  func.func @_color_affine_kernel(%arg0: i32, %arg1: i32, %arg2: memref<6x2xf32, #tpu.memory_space<vmem>>, %arg3: memref<6x256xf32, #tpu.memory_space<vmem>>, %arg4: memref<6x256xf32, #tpu.memory_space<vmem>>) attributes {dimension_semantics = [#tpu.dimension_semantics<parallel>, #tpu.dimension_semantics<parallel>], iteration_bounds = array<i64: 1, 1>, scalar_prefetch = 0 : i64, scratch_operands = 0 : i64, tpu.core_type = #tpu.core_type<tc>, window_params = [{transform_indices = @transform_0, window_bounds = array<i64: 6, 2>}, {transform_indices = @transform_1, window_bounds = array<i64: 6, 256>}, {transform_indices = @transform_2, window_bounds = array<i64: 6, 256>}]} {
    %c0 = arith.constant 0 : index
    %c0_0 = arith.constant 0 : index
    %0 = vector.load %arg2[%c0, %c0_0] : memref<6x2xf32, #tpu.memory_space<vmem>>, vector<6x2xf32>
    %1 = vector.extract_strided_slice %0 {offsets = [0, 0], sizes = [6, 1], strides = [1, 1]} : vector<6x2xf32> to vector<6x1xf32>
    %2 = vector.extract_strided_slice %0 {offsets = [0, 1], sizes = [6, 1], strides = [1, 1]} : vector<6x2xf32> to vector<6x1xf32>
    %c0_1 = arith.constant 0 : index
    %c0_2 = arith.constant 0 : index
    %3 = vector.load %arg3[%c0_1, %c0_2] : memref<6x256xf32, #tpu.memory_space<vmem>>, vector<6x256xf32>
    %4 = vector.broadcast %1 : vector<6x1xf32> to vector<6x256xf32>
    %5 = arith.mulf %3, %4 : vector<6x256xf32>
    %6 = vector.broadcast %2 : vector<6x1xf32> to vector<6x256xf32>
    %7 = arith.addf %5, %6 : vector<6x256xf32>
    %c0_3 = arith.constant 0 : index
    %c0_4 = arith.constant 0 : index
    %8 = vector.load %arg4[%c0_3, %c0_4] : memref<6x256xf32, #tpu.memory_space<vmem>>, vector<6x256xf32>
    tpu.vector_store %arg4[%c0_3, %c0_4], %7 {strides = array<i32>} : memref<6x256xf32, #tpu.memory_space<vmem>>, vector<6x256xf32>,
    return
  }
  func.func @transform_0(%arg0: i32, %arg1: i32) -> (i32, i32) {
    %c0_i32 = arith.constant 0 : i32
    %c0_i32_0 = arith.constant 0 : i32
    return %arg0, %c0_i32 : i32, i32
  }
  func.func @transform_1(%arg0: i32, %arg1: i32) -> (i32, i32) {
    %c0_i32 = arith.constant 0 : i32
    return %arg0, %arg1 : i32, i32
  }
  func.func @transform_2(%arg0: i32, %arg1: i32) -> (i32, i32) {
    %c0_i32 = arith.constant 0 : i32
    return %arg0, %arg1 : i32, i32
  }
}

</mosaic_0001>

<llo_original>
// kernel: tpu_custom_call.1
$region0: #{tpu_custom_call.1}
  #allocation0 [shape = 'u32[]', space=smem, size = 0x4, offset = 0x4, fixed_abs, tag = 'smem constant byte address 0x4 - core index']
  #allocation1 [shape = 'u32[144,128]{1,0:T(1,128)}', space=vmem, size = 0x12000, scoped, tag = 'internal scratch']
  %s0 = inlined_call_operand.vmem [shape: f32[6,2], index: 0, kind: input, shape index: {}]
  %s1 = inlined_call_operand.hbm [shape: f32[6,256], index: 1, kind: input, shape index: {}]
  %s2 = inlined_call_operand.hbm [shape: f32[6,256], index: 2, kind: output, shape index: {}]
  %s3 = sld [smem:[#allocation0]]
  $region22: #{tpu_custom_call.1} parent=0
    _
  %s5 = ssub.s32 1, %s3
  %s6 = scalar_select 0, %s5, %s3
  $region1: #{tpu_custom_call.1} parent=0
    #allocation2 [shape = 'u8[8192]{0}', space=vmem, size = 0x2000, scoped, tag = 'input window, operand 1, single buffered']
    #allocation3 [shape = 's32[1]{0}', space=sflag, size = 0x4, scoped, tag = 'scoped memory for tpu_custom_call.1']
    #allocation4 [shape = 's32[1]{0}', space=sflag, size = 0x4, scoped, tag = 'scoped memory for tpu_custom_call.1']
    #allocation5 [shape = 'u8[8192]{0}', space=vmem, size = 0x2000, scoped, tag = 'output window, operand 0, single buffered']
    %7 = vsyncpa [#allocation3], 0
    %8 = vsyncpa [#allocation4], 0
    // Predicated region
    $region2: #{tpu_custom_call.1} parent=1 // pred_check
      _
    $region3: #{tpu_custom_call.1} parent=1 // pred_check_branch
      %10 = sbr.rel (0) target = $region5
    $region4: #{tpu_custom_call.1} parent=1 // pred_region
      _
    $region5: #{tpu_custom_call.1} parent=1 // pred_fallthru
      _
    // Predicated region
    $region6: #{tpu_custom_call.1} parent=1 // pred_check
      _
    $region7: #{tpu_custom_call.1} parent=1 // pred_check_branch
      %12 = sbr.rel (0) target = $region9
    $region8: #{tpu_custom_call.1} parent=1 // pred_region
      %s14 = ssub.s32 256, 256
      %15 = vsyncadd [#allocation3], %s14
      %s17 = sshll.u32 [#allocation2], 4
      %s18 = int_to_ptr.vmem [resolvable:$true] %s17
      %20 = dma.hbm_to_vmem [thread:$0]  %s1, 256, %s18, [#allocation3]
    $region9: #{tpu_custom_call.1} parent=1 // pred_fallthru
      _
    // Predicated region
    $region10: #{tpu_custom_call.1} parent=1 // pred_check
      _
    $region11: #{tpu_custom_call.1} parent=1 // pred_check_branch
      %22 = sbr.rel (0) target = $region13
    $region12: #{tpu_custom_call.1} parent=1 // pred_region
      %23 = dma.done [#allocation3], 256
    $region13: #{tpu_custom_call.1} parent=1 // pred_fallthru
      _
    %v24 = vld [vmem:[%s0] sm:$0x3f]
    %v25 = vld [vmem:[#allocation2] sm:$0x3f]
    %v26 = vld [vmem:[#allocation2 + $0x8] sm:$0x3f]
    %28 = vset.pattern.permute.xlu0 0
    %29 = vperm.xlu0 %28, %v24
    %v30 = vpop.permute.xlu0 %29
    %v32 = vmul.f32 %v25, %v30
    %v33 = vmul.f32 %v26, %v30
    %34 = vset.pattern.permute.xlu0 1
    %35 = vperm.xlu0 %34, %v24
    %v36 = vpop.permute.xlu0 %35
    %v38 = vadd.f32 %v32, %v36
    %v39 = vadd.f32 %v33, %v36
    %40 = vst [vmem:[#allocation5] sm:$0x3f] %v38
    %41 = vst [vmem:[#allocation5 + $0x8] sm:$0x3f] %v39
    // Predicated region
    $region14: #{tpu_custom_call.1} parent=1 // pred_check
      _
    $region15: #{tpu_custom_call.1} parent=1 // pred_check_branch
      %43 = sbr.rel (0) target = $region17
    $region16: #{tpu_custom_call.1} parent=1 // pred_region
      %s45 = ssub.s32 256, 256
      %46 = vsyncadd [#allocation4], %s45
      %s48 = sshll.u32 [#allocation5], 4
      %s49 = int_to_ptr.vmem [resolvable:$true] %s48
      %51 = dma.vmem_to_hbm [thread:$0]  %s49, 256, %s2, [#allocation4]
    $region17: #{tpu_custom_call.1} parent=1 // pred_fallthru
      _
    // Predicated region
    $region18: #{tpu_custom_call.1} parent=1 // pred_check
      _
    $region19: #{tpu_custom_call.1} parent=1 // pred_check_branch
      %53 = sbr.rel (0) target = $region21
    $region20: #{tpu_custom_call.1} parent=1 // pred_region
      %54 = dma.done [#allocation4], 256
    $region21: #{tpu_custom_call.1} parent=1 // pred_fallthru
      _
    %55 = vsyncpa [#allocation3], 1
    %56 = vsyncpa [#allocation4], 1

</llo_original>
